<compile_context>
chip_gen: v6e
topology: v6e:2x2x1
jax: 0.10.0
libtpu: 0.0.40
codegen_flags: <defaults>
</compile_context>

<pallas_src>
import functools

import jax
import jax.numpy as jnp
import numpy as np
from jax.experimental import pallas as pl
from jax.experimental.pallas import tpu as pltpu


# ----------------------------- Pallas kernel ------------------------------- #
def _downsample_conv_kernel(planes_ref, w_ref, b_ref, o_ref, *, toh, owp, k3c, cp, cout):
    # planes_ref: (1, 2, toh, owp+1, 3C)  tap planes for `toh` output rows
    # w_ref     : (3, 3C, Cp)             per-column-tap weight, C_out padded to Cp
    # b_ref     : (1, Cp)                 f32 bias (padded)
    # o_ref     : (1, toh, owp, C_out)    unpadded-channel output tile
    m = toh * owp
    acc = jnp.zeros((m, cp), jnp.float32)
    # 3 column taps, statically unrolled; each is a contiguous slice (kw=2 has a
    # +1 sublane offset -- acknowledged, low priority) and one fat MXU dot (K=3C).
    for kw in range(3):
        d = kw // 2
        tap = planes_ref[0, kw % 2, :, d:d + owp, :]          # (toh, owp, 3C)
        acc += jnp.dot(tap.reshape(m, k3c), w_ref[kw],
                       preferred_element_type=jnp.float32)
    out = acc + b_ref[...]
    # Drop the Cp channel padding BEFORE writeback so padded lanes never hit HBM.
    o_ref[...] = out[:, :cout].reshape(1, toh, owp, cout).astype(o_ref.dtype)


# ----------------------------- wrapper helpers ------------------------------ #
def _to_tap_planes(x_nchw, oh, owp, compute_dtype):
    """NCHW -> (B, 2, OH, OWp+1, 3C) tap planes (see header comment for layout)."""
    b, c, h, w = x_nchw.shape
    x = x_nchw.astype(compute_dtype)              # cast FIRST: halves wrapper HBM traffic
    x = jnp.transpose(x, (0, 2, 3, 1))            # NHWC  (TODO(synk): carry NHWC end-to-end)
    hp = 2 * (oh + 1)
    wp = 2 * (owp + 1)
    x = jnp.pad(x, ((0, 0), (1, hp - h - 1), (1, wp - w - 1), (0, 0)))
    x = x.reshape(b, oh + 1, 2, owp + 1, 2, c)    # [b, i, row_par, j, col_par, ci]
    x = jnp.transpose(x, (0, 4, 1, 3, 2, 5))      # [b, col_par, i, j, row_par, ci]
    planes = jnp.concatenate(                     # fold kernel-row phase into lanes
        [x[:, :, 0:oh, :, 0],                     # kh = 0  (even rows)
         x[:, :, 0:oh, :, 1],                     # kh = 1  (odd rows)
         x[:, :, 1:oh + 1, :, 0]],                # kh = 2  (even rows, +1 row halo)
        axis=-1)                                  # (b, 2, oh, owp+1, 3c)
    return planes


def _pick_tiling(b, oh, owp, c, cp, compute_itemsize, out_itemsize):
    """Derive the output-row tile and the VMEM limit from the chip's capacity."""
    try:
        vmem_cap = int(pltpu.get_tpu_info().vmem_capacity_bytes)
    except Exception:
        vmem_cap = 64 * 1024 * 1024               # conservative fallback (v7x-sized)
    # Never request all of physical VMEM; leave headroom for compiler scratch.
    vmem_limit = max(16 << 20, min(int(0.75 * vmem_cap), vmem_cap - (16 << 20)))
    per_row = (2 * 2 * (owp + 1) * 3 * c * compute_itemsize   # planes block (x2 buffers)
               + 2 * owp * c * out_itemsize                   # output block (x2 buffers)
               + 3 * owp * cp * 4)                            # f32 accumulator + temporaries
    fixed = 2 * 3 * 3 * c * cp * compute_itemsize + 2 * cp * 4 + (1 << 20)
    toh_max = max(1, int((0.8 * vmem_limit - fixed) // per_row))
    if b == 1:                                    # keep both TCs busy on 2-core chips
        toh_max = min(toh_max, max(1, (oh + 1) // 2))
    toh_max = min(toh_max, oh)
    # Largest divisor of oh within budget -> no padded/garbage output rows.
    toh = max(d for d in range(1, toh_max + 1) if oh % d == 0)
    return toh, vmem_limit


@functools.partial(jax.jit, static_argnames=("compute_dtype", "out_dtype"))
def _downsample_forward(x_nchw, w3, bias, *, compute_dtype, out_dtype):
    b, c, h, w = x_nchw.shape
    oh = (h - 1) // 2 + 1
    ow = (w - 1) // 2 + 1
    owp = ((ow + 7) // 8) * 8                     # sublane-friendly output width
    k3c = w3.shape[-2]                            # 3 * C_in
    cp = w3.shape[-1]                             # padded C_out (multiple of 128)

    toh, vmem_limit = _pick_tiling(
        b, oh, owp, c, cp,
        np.dtype(compute_dtype).itemsize, np.dtype(out_dtype).itemsize)
    n_row_tiles = oh // toh

    planes = _to_tap_planes(x_nchw, oh, owp, compute_dtype)

    kernel = functools.partial(_downsample_conv_kernel,
                               toh=toh, owp=owp, k3c=k3c, cp=cp, cout=c)

    out = pl.pallas_call(
        kernel,
        out_shape=jax.ShapeDtypeStruct((b, oh, owp, c), out_dtype),
        grid_spec=pltpu.PrefetchScalarGridSpec(
            num_scalar_prefetch=0,
            grid=(b, n_row_tiles),
            in_specs=[
                # toh output rows of tap planes per step (VMEM scales with toh).
                pl.BlockSpec((1, 2, toh, owp + 1, k3c),
                             lambda bb, i: (bb, 0, i, 0, 0)),
                # Weight / bias: constant blocks, fetched once.
                pl.BlockSpec((3, k3c, cp), lambda bb, i: (0, 0, 0)),
                pl.BlockSpec((1, cp), lambda bb, i: (0, 0)),
            ],
            out_specs=pl.BlockSpec((1, toh, owp, c),
                                   lambda bb, i: (bb, i, 0, 0)),
        ),
        compiler_params=pltpu.CompilerParams(
            dimension_semantics=("parallel", "parallel"),
            vmem_limit_bytes=vmem_limit,
        ),
    )(planes, w3, bias)

    out = out[:, :, :ow, :]                       # drop column padding (if any)
    return jnp.transpose(out, (0, 3, 1, 2))       # NCHW


# ----------------------------- module wrapper ------------------------------- #
class DownsampleLayer:
    """JAX/Pallas port of models/Layers.py::DownsampleLayer (use_conv=True)."""

    def __init__(self, num_channels, use_conv=True, key=None,
                 compute_dtype=jnp.bfloat16, out_dtype=jnp.float32):
        if not use_conv:
            raise ValueError("Only use_conv=True is supported in Downsampling layer")
        self.num_channels = num_channels
        self.compute_dtype = compute_dtype        # bf16 default: halves HBM/VMEM traffic
        self.out_dtype = out_dtype
        if key is None:
            key = jax.random.PRNGKey(0)
        kw_key, kb_key = jax.random.split(key)
        fan_in = num_channels * 3 * 3
        bound = 1.0 / np.sqrt(fan_in)
        # PyTorch Conv2d layout: (C_out, C_in, KH, KW); uniform(-bound, bound).
        self.weight = jax.random.uniform(
            kw_key, (num_channels, num_channels, 3, 3),
            minval=-bound, maxval=bound, dtype=jnp.float32)
        self.bias = jax.random.uniform(
            kb_key, (num_channels,), minval=-bound, maxval=bound, dtype=jnp.float32)

        # Pack weight per column tap: (3, 3*C_in, Cp); GEMM K packs the 3 kernel
        # rows, C_out padded to a multiple of 128 for a clean MXU N dim.
        c = num_channels
        cp = ((c + 127) // 128) * 128
        w3 = jnp.transpose(self.weight, (3, 2, 1, 0)).reshape(3, 3 * c, c)
        self._w = jnp.pad(w3, ((0, 0), (0, 0), (0, cp - c))).astype(compute_dtype)
        self._b = jnp.pad(self.bias, (0, cp - c)).reshape(1, cp).astype(jnp.float32)

    def __call__(self, x_nchw, emb=None, cond=None):
        # emb / cond are accepted (as in the PyTorch forward) but unused.
        assert x_nchw.shape[1] == self.num_channels
        return _downsample_forward(x_nchw, self._w, self._b,
                                   compute_dtype=self.compute_dtype,
                                   out_dtype=self.out_dtype)


# ----------------------------------- main ----------------------------------- #
if __name__ == "__main__":
    key = jax.random.PRNGKey(0)
    k_x, k_params = jax.random.split(key)

    B, C, H, W = 2, 4, 16, 16
    x = jax.random.normal(k_x, (B, C, H, W), dtype=jnp.float32)
    emb = jax.random.normal(jax.random.PRNGKey(1), (B, 32), dtype=jnp.float32)   # unused
    cond = jax.random.normal(jax.random.PRNGKey(2), (B, 32), dtype=jnp.float32)  # unused

    def conv_ref(inp, layer):
        r = jax.lax.conv_general_dilated(
            inp, layer.weight, window_strides=(2, 2), padding=((1, 1), (1, 1)),
            dimension_numbers=("NCHW", "OIHW", "NCHW"))
        return r + layer.bias.reshape(1, C, 1, 1)

    # f32 compute path (tight check).
    layer_f32 = DownsampleLayer(num_channels=C, use_conv=True, key=k_params,
                                compute_dtype=jnp.float32, out_dtype=jnp.float32)
    out_f32 = jax.block_until_ready(layer_f32(x, emb, cond))
    ref = conv_ref(x, layer_f32)
    assert out_f32.shape == (B, C, H // 2, W // 2), out_f32.shape
    np.testing.assert_allclose(np.asarray(out_f32), np.asarray(ref), rtol=1e-5, atol=1e-5)

    # Odd spatial size (exercises padding / halo logic).
    x_odd = jax.random.normal(jax.random.PRNGKey(3), (B, C, 15, 15), dtype=jnp.float32)
    out_odd = jax.block_until_ready(layer_f32(x_odd, emb, cond))
    ref_odd = conv_ref(x_odd, layer_f32)
    assert out_odd.shape == (B, C, 8, 8), out_odd.shape
    np.testing.assert_allclose(np.asarray(out_odd), np.asarray(ref_odd), rtol=1e-5, atol=1e-5)

    # Default bf16 compute path (f32 accumulate; intentional precision tradeoff).
    layer_bf16 = DownsampleLayer(num_channels=C, use_conv=True, key=k_params)
    out_bf16 = jax.block_until_ready(layer_bf16(x, emb, cond))
    np.testing.assert_allclose(np.asarray(out_bf16), np.asarray(ref),
                               rtol=5e-2, atol=5e-2)

    print("KERNEL_OK")
</pallas_src>

<mosaic_0001>
module attributes {stable_mosaic.version = 11 : i64} {
  func.func @_downsample_conv_kernel(%arg0: i32, %arg1: i32, %arg2: memref<1x2x8x9x12xf32, #tpu.memory_space<vmem>>, %arg3: memref<3x12x128xf32, #tpu.memory_space<vmem>>, %arg4: memref<1x128xf32, #tpu.memory_space<vmem>>, %arg5: memref<1x8x8x4xf32, #tpu.memory_space<vmem>>) attributes {dimension_semantics = [#tpu.dimension_semantics<parallel>, #tpu.dimension_semantics<parallel>], iteration_bounds = array<i64: 2, 1>, scalar_prefetch = 0 : i64, scratch_operands = 0 : i64, tpu.core_type = #tpu.core_type<tc>, window_params = [{transform_indices = @transform_0, window_bounds = array<i64: 1, 2, 8, 9, 12>}, {pipeline_mode = #tpu.pipeline_mode<synchronous>, transform_indices = @transform_1, window_bounds = array<i64: 3, 12, 128>}, {pipeline_mode = #tpu.pipeline_mode<synchronous>, transform_indices = @transform_2, window_bounds = array<i64: 1, 128>}, {transform_indices = @transform_3, window_bounds = array<i64: 1, 8, 8, 4>}]} {
    %cst = arith.constant 0.000000e+00 : f32
    %0 = vector.broadcast %cst : f32 to vector<64x128xf32>
    %c0 = arith.constant 0 : index
    %c0_0 = arith.constant 0 : index
    %c0_1 = arith.constant 0 : index
    %c0_2 = arith.constant 0 : index
    %c0_3 = arith.constant 0 : index
    %1 = vector.load %arg2[%c0, %c0_0, %c0_1, %c0_2, %c0_3] : memref<1x2x8x9x12xf32, #tpu.memory_space<vmem>>, vector<1x1x8x8x12xf32>
    %2 = vector.shape_cast %1 : vector<1x1x8x8x12xf32> to vector<8x8x12xf32>
    %3 = vector.shape_cast %2 : vector<8x8x12xf32> to vector<64x12xf32>
    %c0_4 = arith.constant 0 : index
    %c0_5 = arith.constant 0 : index
    %c0_6 = arith.constant 0 : index
    %4 = vector.load %arg3[%c0_4, %c0_5, %c0_6] : memref<3x12x128xf32, #tpu.memory_space<vmem>>, vector<1x12x128xf32>
    %5 = vector.shape_cast %4 : vector<1x12x128xf32> to vector<12x128xf32>
    %cst_7 = arith.constant dense<0.000000e+00> : vector<64x128xf32>
    %6 = tpu.matmul %3, %5, %cst_7 {dimension_numbers = #tpu.dot_dimension_numbers<[1], [0], [0], [1], [0, 0, 1, 1], [], []>} : vector<64x12xf32>, vector<12x128xf32>, vector<64x128xf32> -> vector<64x128xf32>
    %7 = arith.addf %0, %6 : vector<64x128xf32>
    %c0_8 = arith.constant 0 : index
    %c1 = arith.constant 1 : index
    %c0_9 = arith.constant 0 : index
    %c0_10 = arith.constant 0 : index
    %c0_11 = arith.constant 0 : index
    %8 = vector.load %arg2[%c0_8, %c1, %c0_9, %c0_10, %c0_11] : memref<1x2x8x9x12xf32, #tpu.memory_space<vmem>>, vector<1x1x8x8x12xf32>
    %9 = vector.shape_cast %8 : vector<1x1x8x8x12xf32> to vector<8x8x12xf32>
    %10 = vector.shape_cast %9 : vector<8x8x12xf32> to vector<64x12xf32>
    %c1_12 = arith.constant 1 : index
    %c0_13 = arith.constant 0 : index
    %c0_14 = arith.constant 0 : index
    %11 = vector.load %arg3[%c1_12, %c0_13, %c0_14] : memref<3x12x128xf32, #tpu.memory_space<vmem>>, vector<1x12x128xf32>
    %12 = vector.shape_cast %11 : vector<1x12x128xf32> to vector<12x128xf32>
    %cst_15 = arith.constant dense<0.000000e+00> : vector<64x128xf32>
    %13 = tpu.matmul %10, %12, %cst_15 {dimension_numbers = #tpu.dot_dimension_numbers<[1], [0], [0], [1], [0, 0, 1, 1], [], []>} : vector<64x12xf32>, vector<12x128xf32>, vector<64x128xf32> -> vector<64x128xf32>
    %14 = arith.addf %7, %13 : vector<64x128xf32>
    %c0_16 = arith.constant 0 : index
    %c0_17 = arith.constant 0 : index
    %c0_18 = arith.constant 0 : index
    %c1_19 = arith.constant 1 : index
    %c0_20 = arith.constant 0 : index
    %15 = vector.load %arg2[%c0_16, %c0_17, %c0_18, %c1_19, %c0_20] : memref<1x2x8x9x12xf32, #tpu.memory_space<vmem>>, vector<1x1x8x8x12xf32>
    %16 = vector.shape_cast %15 : vector<1x1x8x8x12xf32> to vector<8x8x12xf32>
    %17 = vector.shape_cast %16 : vector<8x8x12xf32> to vector<64x12xf32>
    %c2 = arith.constant 2 : index
    %c0_21 = arith.constant 0 : index
    %c0_22 = arith.constant 0 : index
    %18 = vector.load %arg3[%c2, %c0_21, %c0_22] : memref<3x12x128xf32, #tpu.memory_space<vmem>>, vector<1x12x128xf32>
    %19 = vector.shape_cast %18 : vector<1x12x128xf32> to vector<12x128xf32>
    %cst_23 = arith.constant dense<0.000000e+00> : vector<64x128xf32>
    %20 = tpu.matmul %17, %19, %cst_23 {dimension_numbers = #tpu.dot_dimension_numbers<[1], [0], [0], [1], [0, 0, 1, 1], [], []>} : vector<64x12xf32>, vector<12x128xf32>, vector<64x128xf32> -> vector<64x128xf32>
    %21 = arith.addf %14, %20 : vector<64x128xf32>
    %c0_24 = arith.constant 0 : index
    %c0_25 = arith.constant 0 : index
    %22 = vector.load %arg4[%c0_24, %c0_25] : memref<1x128xf32, #tpu.memory_space<vmem>>, vector<1x128xf32>
    %23 = vector.broadcast %22 : vector<1x128xf32> to vector<64x128xf32>
    %24 = arith.addf %21, %23 : vector<64x128xf32>
    %25 = vector.extract_strided_slice %24 {offsets = [0, 0], sizes = [64, 4], strides = [1, 1]} : vector<64x128xf32> to vector<64x4xf32>
    %26 = vector.shape_cast %25 : vector<64x4xf32> to vector<1x8x8x4xf32>
    %c0_26 = arith.constant 0 : index
    %c0_27 = arith.constant 0 : index
    %c0_28 = arith.constant 0 : index
    %c0_29 = arith.constant 0 : index
    %27 = vector.load %arg5[%c0_26, %c0_27, %c0_28, %c0_29] : memref<1x8x8x4xf32, #tpu.memory_space<vmem>>, vector<1x8x8x4xf32>
    tpu.vector_store %arg5[%c0_26, %c0_27, %c0_28, %c0_29], %26 {strides = array<i32>} : memref<1x8x8x4xf32, #tpu.memory_space<vmem>>, vector<1x8x8x4xf32>,
    return
  }
  func.func @transform_0(%arg0: i32, %arg1: i32) -> (i32, i32, i32, i32, i32) {
    %c0_i32 = arith.constant 0 : i32
    %c0_i32_0 = arith.constant 0 : i32
    %c0_i32_1 = arith.constant 0 : i32
    %c0_i32_2 = arith.constant 0 : i32
    return %arg0, %c0_i32, %arg1, %c0_i32_0, %c0_i32_1 : i32, i32, i32, i32, i32
  }
  func.func @transform_1(%arg0: i32, %arg1: i32) -> (i32, i32, i32) {
    %c0_i32 = arith.constant 0 : i32
    %c0_i32_0 = arith.constant 0 : i32
    %c0_i32_1 = arith.constant 0 : i32
    %c0_i32_2 = arith.constant 0 : i32
    return %c0_i32, %c0_i32_0, %c0_i32_1 : i32, i32, i32
  }
  func.func @transform_2(%arg0: i32, %arg1: i32) -> (i32, i32) {
    %c0_i32 = arith.constant 0 : i32
    %c0_i32_0 = arith.constant 0 : i32
    %c0_i32_1 = arith.constant 0 : i32
    return %c0_i32, %c0_i32_0 : i32, i32
  }
  func.func @transform_3(%arg0: i32, %arg1: i32) -> (i32, i32, i32, i32) {
    %c0_i32 = arith.constant 0 : i32
    %c0_i32_0 = arith.constant 0 : i32
    %c0_i32_1 = arith.constant 0 : i32
    return %arg0, %arg1, %c0_i32, %c0_i32_0 : i32, i32, i32, i32
  }
}

</mosaic_0001>

<llo_original>
// kernel: _downsample_forward.1
$region0: #{_downsample_forward.1}
  #allocation0 [shape = 'u32[]', space=smem, size = 0x4, offset = 0x4, fixed_abs, tag = 'smem constant byte address 0x4 - core index']
  #allocation1 [shape = 'u32[144,128]{1,0:T(1,128)}', space=vmem, size = 0x12000, scoped, tag = 'internal scratch']
  %s0 = inlined_call_operand.vmem [shape: f32[2,2,8,9,12], index: 0, kind: input, shape index: {}]
  %s1 = inlined_call_operand.vmem [shape: f32[3,12,128], index: 1, kind: input, shape index: {}]
  %s2 = inlined_call_operand.vmem [shape: f32[1,128], index: 2, kind: input, shape index: {}]
  %s3 = inlined_call_operand.vmem [shape: f32[2,8,8,4], index: 3, kind: output, shape index: {}]
  %s4 = sld [smem:[#allocation0]]
  $region45: #{_downsample_forward.1} parent=0
    _
  %s6 = ssub.s32 1, %s4
  %s7 = scalar_select 0, %s6, %s4
  loop: start=0, step=1, limit=4
  $region2: #{_downsample_forward.1} parent=0 // loop_pre_header
    _
  $region3: #{_downsample_forward.1} parent=0 // loop_header
    %s9 = sphi 0, %s13
    %p10 = scmp.ge.s32.totalorder %s9, 4
    %s16 = sphi 0, %s28
    %s17 = sphi 0, %s24
    %s18 = sphi 0, %s16
    %s19 = sphi 0, %s17
    %s20 = sphi 0, %s18
    %s21 = sphi 0, %s19
    %s33 = sphi 0, %s35
    %s36 = sphi 0, %s33
    %s37 = sphi 0, %s36
    %s53 = sphi 0, %s37
    %s57 = sphi 0, %s57
    %s59 = sphi 0, %s57
    %s60 = sphi 0, %s59
    %s74 = sphi 0, %s60
    %s78 = sphi 0, %s78
    %s80 = sphi 0, %s78
    %s81 = sphi 0, %s80
    %s95 = sphi 0, %s81
    %s103 = sphi 0, %s105
    %s106 = sphi 0, %s103
    %s107 = sphi 0, %s106
    %s123 = sphi 0, %s107
  $region4: #{_downsample_forward.1} parent=0 // loop_header_branch
    %12 = sbr.rel (%p10) target = $region8
  $region5: #{_downsample_forward.1} parent=0 // loop_body
    %s14 = ssub.s32 %s9, 1
    %s15 = ssub.s32 %s9, 2
    %s22 = sadd.s32 1, %s17
    %p23 = scmp.ge.s32.totalorder %s22, 1
    %s24 = scalar_select %p23, 0, %s22
    %s25 = sadd.s32 1, %s16
    %s26 = scalar_select %p23, %s25, %s16
    %p27 = scmp.ge.s32.totalorder %s26, 2
    %s28 = scalar_select %p27, 0, %s26
    %s29 = ssub.s32 %s16, %s28
    %s30 = ssub.s32 %s17, %s24
    %s31 = sor.u32 %s29, %s30
    %p32 = scmp.eq.s32.totalorder %s31, 0
    %s34 = sadd.s32 %s33, 1
    %s35 = scalar_select %p32, %s33, %s34
    %p38 = pneg %p32
    %p39 = scmp.eq.s32.totalorder %s9, 1
    %p40 = por %p38, %p39
    %p41 = scmp.ne.s32.totalorder %s33, %s36
    %p42 = scmp.eq.s32.totalorder %s9, 0
    %p43 = por %p41, %p42
    %p44 = scmp.ne.s32.totalorder %s33, %s36
    %p45 = scmp.eq.s32.totalorder %s14, 1
    %p46 = por %p44, %p45
    %p47 = scmp.ne.s32.totalorder %s36, %s37
    %p48 = scmp.eq.s32.totalorder %s14, 0
    %p49 = por %p47, %p48
    %p50 = scmp.ne.s32.totalorder %s36, %s37
    %p51 = scmp.eq.s32.totalorder %s15, 1
    %p52 = por %p50, %p51
    %p54 = scmp.ne.s32.totalorder %s37, %s53
    %p55 = scmp.eq.s32.totalorder %s15, 0
    %p56 = por %p54, %p55
    %s58 = sadd.s32 %s57, 1
    %p61 = scmp.eq.s32.totalorder %s9, 1
    %p62 = scmp.ne.s32.totalorder %s57, %s59
    %p63 = scmp.eq.s32.totalorder %s9, 0
    %p64 = por %p62, %p63
    %p65 = scmp.ne.s32.totalorder %s57, %s59
    %p66 = scmp.eq.s32.totalorder %s14, 1
    %p67 = por %p65, %p66
    %p68 = scmp.ne.s32.totalorder %s59, %s60
    %p69 = scmp.eq.s32.totalorder %s14, 0
    %p70 = por %p68, %p69
    %p71 = scmp.ne.s32.totalorder %s59, %s60
    %p72 = scmp.eq.s32.totalorder %s15, 1
    %p73 = por %p71, %p72
    %p75 = scmp.ne.s32.totalorder %s60, %s74
    %p76 = scmp.eq.s32.totalorder %s15, 0
    %p77 = por %p75, %p76
    %s79 = sadd.s32 %s78, 1
    %p82 = scmp.eq.s32.totalorder %s9, 1
    %p83 = scmp.ne.s32.totalorder %s78, %s80
    %p84 = scmp.eq.s32.totalorder %s9, 0
    %p85 = por %p83, %p84
    %p86 = scmp.ne.s32.totalorder %s78, %s80
    %p87 = scmp.eq.s32.totalorder %s14, 1
    %p88 = por %p86, %p87
    %p89 = scmp.ne.s32.totalorder %s80, %s81
    %p90 = scmp.eq.s32.totalorder %s14, 0
    %p91 = por %p89, %p90
    %p92 = scmp.ne.s32.totalorder %s80, %s81
    %p93 = scmp.eq.s32.totalorder %s15, 1
    %p94 = por %p92, %p93
    %p96 = scmp.ne.s32.totalorder %s81, %s95
    %p97 = scmp.eq.s32.totalorder %s15, 0
    %p98 = por %p96, %p97
    %s99 = ssub.s32 %s16, %s28
    %s100 = ssub.s32 %s17, %s24
    %s101 = sor.u32 %s99, %s100
    %p102 = scmp.eq.s32.totalorder %s101, 0
    %s104 = sadd.s32 %s103, 1
    %s105 = scalar_select %p102, %s103, %s104
    %p108 = pneg %p102
    %p109 = scmp.eq.s32.totalorder %s9, 1
    %p110 = por %p108, %p109
    %p111 = scmp.ne.s32.totalorder %s103, %s106
    %p112 = scmp.eq.s32.totalorder %s9, 0
    %p113 = por %p111, %p112
    %p114 = scmp.ne.s32.totalorder %s103, %s106
    %p115 = scmp.eq.s32.totalorder %s14, 1
    %p116 = por %p114, %p115
    %p117 = scmp.ne.s32.totalorder %s106, %s107
    %p118 = scmp.eq.s32.totalorder %s14, 0
    %p119 = por %p117, %p118
    %p120 = scmp.ne.s32.totalorder %s106, %s107
    %p121 = scmp.eq.s32.totalorder %s15, 1
    %p122 = por %p120, %p121
    %p124 = scmp.ne.s32.totalorder %s107, %s123
    %p125 = scmp.eq.s32.totalorder %s15, 0
    %p126 = por %p124, %p125
    %p127 = scmp.le.s32.totalorder 1, %s9
    %p128 = scmp.lt.s32.totalorder %s9, 3
    %p129 = pnand %p127, %p128
    %p130 = pneg %p129
    // Predicated region
    $region9: #{_downsample_forward.1} parent=5 // pred_check
      _
    $region10: #{_downsample_forward.1} parent=5 // pred_check_branch
      %132 = sbr.rel (%p129) target = $region12
    $region11: #{_downsample_forward.1} parent=5 // pred_region
      %s133 = ssub.s32 %s9, 1
      // Predicated region
      $region13: #{_downsample_forward.1} parent=11 // pred_check
        %p134 = pneg %p70
      $region14: #{_downsample_forward.1} parent=11 // pred_check_branch
        %136 = sbr.rel (%p134) target = $region16
      $region15: #{_downsample_forward.1} parent=11 // pred_region
        _
      $region16: #{_downsample_forward.1} parent=11 // pred_fallthru
        _
      // Predicated region
      $region17: #{_downsample_forward.1} parent=11 // pred_check
        %p137 = pneg %p91
      $region18: #{_downsample_forward.1} parent=11 // pred_check_branch
        %139 = sbr.rel (%p137) target = $region20
      $region19: #{_downsample_forward.1} parent=11 // pred_region
        _
      $region20: #{_downsample_forward.1} parent=11 // pred_fallthru
        _
    $region12: #{_downsample_forward.1} parent=5 // pred_fallthru
      _
    %p140 = scmp.lt.s32.totalorder %s9, 2
    // Predicated region
    $region21: #{_downsample_forward.1} parent=5 // pred_check
      %p141 = pneg %p140
    $region22: #{_downsample_forward.1} parent=5 // pred_check_branch
      %143 = sbr.rel (%p141) target = $region24
    $region23: #{_downsample_forward.1} parent=5 // pred_region
      // Predicated region
      $region25: #{_downsample_forward.1} parent=23 // pred_check
        %p144 = pneg %p43
      $region26: #{_downsample_forward.1} parent=23 // pred_check_branch
        %146 = sbr.rel (%p144) target = $region28
      $region27: #{_downsample_forward.1} parent=23 // pred_region
        %s147 = smul.u32 8, %s17
        %p148 = scmp.lt.s32.totalorder %s16, 1
        %s149 = scalar_select %p148, %s16, 1
        %p150 = scmp.lt.s32.totalorder %s147, 7
        %s151 = scalar_select %p150, %s147, 7
        %s152 = smul.addr %s151, 2
        %s153 = smul.addr %s149, 32
        %s154 = sadd.s32 %s152, %s153
        %s155 = smul.addr %s154, 8
        %s156 = scalar_lea.vmem %s0, %s155
        %s157 = smul.u32 8, %s17
      $region28: #{_downsample_forward.1} parent=23 // pred_fallthru
        _
    $region24: #{_downsample_forward.1} parent=5 // pred_fallthru
      _
    %p158 = scmp.le.s32.totalorder 1, %s9
    %p159 = scmp.lt.s32.totalorder %s9, 3
    %p160 = pnand %p158, %p159
    %p161 = pneg %p160
    // Predicated region
    $region29: #{_downsample_forward.1} parent=5 // pred_check
      _
    $region30: #{_downsample_forward.1} parent=5 // pred_check_branch
      %163 = sbr.rel (%p160) target = $region32
    $region31: #{_downsample_forward.1} parent=5 // pred_region
      %s164 = ssub.s32 %s9, 1
      %s165 = smul.u32 8, %s19
      %p166 = scmp.lt.s32.totalorder %s18, 1
      %s167 = scalar_select %p166, %s18, 1
      %p168 = scmp.lt.s32.totalorder %s165, 7
      %s169 = scalar_select %p168, %s165, 7
      %s170 = smul.addr %s169, 2
      %s171 = smul.addr %s167, 32
      %s172 = sadd.s32 %s170, %s171
      %s173 = smul.addr %s172, 8
      %s174 = scalar_lea.vmem %s0, %s173
      %p175 = pneg %p49
      %p176 = pneg %p46
      %p177 = pneg %p70
      %p178 = pneg %p67
      %p179 = pneg %p91
      %p180 = pneg %p88
      %p181 = pneg %p119
      %p182 = pneg %p116
      %s183 = smul.u32 8, %s19
      %p184 = scmp.lt.s32.totalorder %s18, 1
      %s185 = scalar_select %p184, %s18, 1
      %p186 = scmp.lt.s32.totalorder %s183, 7
      %s187 = scalar_select %p186, %s183, 7
      %s188 = smul.addr %s185, 8
      %s189 = sadd.s32 %s187, %s188
      %s190 = smul.addr %s189, 8
      %s191 = scalar_lea.vmem %s3, %s190
      %s192 = smul.u32 8, %s19
      %p193 = scmp.lt.s32.totalorder %s18, 1
      %s194 = scalar_select %p193, %s18, 1
      %p195 = scmp.lt.s32.totalorder %s192, 7
      %s196 = scalar_select %p195, %s192, 7
      %s197 = smul.addr %s196, 2
      %s198 = smul.addr %s194, 32
      %s199 = sadd.s32 %s197, %s198
      %s200 = smul.addr %s199, 8
      %s201 = scalar_lea.vmem %s0, %s200
      %s202 = smul.u32 8, %s19
      %s203 = smul.u32 8, %s19
      %p204 = scmp.lt.s32.totalorder %s18, 1
      %s205 = scalar_select %p204, %s18, 1
      %p206 = scmp.lt.s32.totalorder %s203, 7
      %s207 = scalar_select %p206, %s203, 7
      %s208 = smul.addr %s205, 8
      %s209 = sadd.s32 %s207, %s208
      %s210 = smul.addr %s209, 8
      %s211 = scalar_lea.vmem %s3, %s210
      %s212 = smul.u32 8, %s19
      %v213 = vld [vmem:[%s201] sm:$0xff]
      %v214 = vld [vmem:[%s201 + $0x10] sm:$0xff]
      %v215 = vld [vmem:[%s201 + $0x20] sm:$0xff]
      %v216 = vld [vmem:[%s201 + $0x30] sm:$0xff]
      %v217 = vld [vmem:[%s201 + $0x40] sm:$0xff]
      %v218 = vld [vmem:[%s201 + $0x50] sm:$0xff]
      %v219 = vld [vmem:[%s201 + $0x60] sm:$0xff]
      %v220 = vld [vmem:[%s201 + $0x70] sm:$0xff]
      %v221 = vld [vmem:[%s1] sm:$0xff]
      %v222 = vld [vmem:[%s1 + $0x8] sm:$0xf]
      %s223 = scalar_lea.vmem %s201, 128
      %v224 = vld [vmem:[%s223] sm:$0xff]
      %v225 = vld [vmem:[%s223 + $0x10] sm:$0xff]
      %v226 = vld [vmem:[%s223 + $0x20] sm:$0xff]
      %v227 = vld [vmem:[%s223 + $0x30] sm:$0xff]
      %v228 = vld [vmem:[%s223 + $0x40] sm:$0xff]
      %v229 = vld [vmem:[%s223 + $0x50] sm:$0xff]
      %v230 = vld [vmem:[%s223 + $0x60] sm:$0xff]
      %v231 = vld [vmem:[%s223 + $0x70] sm:$0xff]
      %s232 = scalar_lea.vmem %s1, 16
      %v233 = vld [vmem:[%s232] sm:$0xff]
      %v234 = vld [vmem:[%s232 + $0x8] sm:$0xf]
      %vm235 = vcmask 97280
      %v237 = vsel %vm235, %v224, 0
      %v240 = vsel %vm235, %v225, 0
      %v243 = vsel %vm235, %v226, 0
      %v246 = vsel %vm235, %v227, 0
      %v249 = vsel %vm235, %v228, 0
      %v252 = vsel %vm235, %v229, 0
      %v255 = vsel %vm235, %v230, 0
      %v258 = vsel %vm235, %v231, 0
      %vm260 = vcmask 1043456
      %v262 = vsel %vm260, %v234, 0
      %264 = vmatprep.subr.mxu0 0.0
      %265 = vmatpush1.msra.mxu0 0.0
      %266 = vmatprep.subr.mxu0 0.0
      %267 = vmatpush1.msra.mxu0 0.0
      %268 = vmatprep.subr.mxu0 0.0
      %269 = vmatpush1.msra.mxu0 0.0
      %270 = vmatprep.subr.mxu0 0.0
      %271 = vmatpush1.msra.mxu0 0.0
      %272 = vmatprep.subr.mxu0 0.0
      %273 = vmatpush1.msra.mxu0 0.0
      %274 = vmatprep.subr.mxu0 0.0
      %275 = vmatpush1.msra.mxu0 0.0
      %276 = vmatprep.subr.mxu0 0.0
      %277 = vmatpush1.msra.mxu0 0.0
      %278 = vmatprep.subr.mxu0 0.0
      %279 = vmatpush1.msra.mxu0 0.0
      %280 = vmatprep.subr.mxu0 0.0
      %281 = vmatpush1.msra.mxu0 0.0
      %282 = vmatprep.subr.mxu0 0.0
      %283 = vmatpush1.msra.mxu0 0.0
      %284 = vmatprep.subr.mxu0 0.0
      %285 = vmatpush1.msra.mxu0 0.0
      %286 = vmatprep.subr.mxu0 0.0
      %287 = vmatpush1.msra.mxu0 0.0
      %288 = vmatprep.subr.mxu0 0.0
      %289 = vmatpush1.msra.mxu0 0.0
      %290 = vmatprep.subr.mxu0 0.0
      %291 = vmatpush1.msra.mxu0 0.0
      %292 = vmatprep.subr.mxu0 0.0
      %293 = vmatpush1.msra.mxu0 %v262
      %294 = vmatprep.subr.mxu0 0.0
      %295 = vmatpush1.msra.mxu0 %v233
      %296 = vmatprep.subr.mxu0 0.0
      %297 = vmatpush2.msra.mxu0 0.0
      %298 = vmatprep.subr.mxu0 0.0
      %299 = vmatpush2.msra.mxu0 0.0
      %300 = vmatprep.subr.mxu0 0.0
      %301 = vmatpush2.msra.mxu0 0.0
      %302 = vmatprep.subr.mxu0 0.0
      %303 = vmatpush2.msra.mxu0 0.0
      %304 = vmatprep.subr.mxu0 0.0
      %305 = vmatpush2.msra.mxu0 0.0
      %306 = vmatprep.subr.mxu0 0.0
      %307 = vmatpush2.msra.mxu0 0.0
      %308 = vmatprep.subr.mxu0 0.0
      %309 = vmatpush2.msra.mxu0 0.0
      %310 = vmatprep.subr.mxu0 0.0
      %311 = vmatpush2.msra.mxu0 0.0
      %312 = vmatprep.subr.mxu0 0.0
      %313 = vmatpush2.msra.mxu0 0.0
      %314 = vmatprep.subr.mxu0 0.0
      %315 = vmatpush2.msra.mxu0 0.0
      %316 = vmatprep.subr.mxu0 0.0
      %317 = vmatpush2.msra.mxu0 0.0
      %318 = vmatprep.subr.mxu0 0.0
      %319 = vmatpush2.msra.mxu0 0.0
      %320 = vmatprep.subr.mxu0 0.0
      %321 = vmatpush2.msra.mxu0 0.0
      %322 = vmatprep.subr.mxu0 0.0
      %323 = vmatpush2.msra.mxu0 0.0
      %324 = vmatprep.subr.mxu0 0.0
      %325 = vmatpush2.msra.mxu0 0.0
      %326 = vmatprep.subr.mxu0 0.0
      %327 = vmatpush2.msra.mxu0 0.0
      %328 = vmatprep.mubr.f32.mxu0 0.0
      %329 = vmatmul.mubr.f32.gmra.mxu0 %v237
      %v330 = vpop.f32.mrf.mxu0
      %v331 = vadd.f32 0.0, %v330
      %v332 = vpop.f32.mrf.mxu0
      %333 = vmatprep.mubr.f32.mxu0 0.0
      %334 = vmatmul.mubr.f32.gmra.mxu0 %v240
      %v335 = vpop.f32.mrf.mxu0
      %v336 = vadd.f32 0.0, %v335
      %v337 = vpop.f32.mrf.mxu0
      %338 = vmatprep.mubr.f32.mxu0 0.0
      %339 = vmatmul.mubr.f32.gmra.mxu0 %v243
      %v340 = vpop.f32.mrf.mxu0
      %v341 = vadd.f32 0.0, %v340
      %v342 = vpop.f32.mrf.mxu0
      %343 = vmatprep.mubr.f32.mxu0 0.0
      %344 = vmatmul.mubr.f32.gmra.mxu0 %v246
      %v345 = vpop.f32.mrf.mxu0
      %v346 = vadd.f32 0.0, %v345
      %v347 = vpop.f32.mrf.mxu0
      %348 = vmatprep.mubr.f32.mxu0 0.0
      %349 = vmatmul.mubr.f32.gmra.mxu0 %v249
      %v350 = vpop.f32.mrf.mxu0
      %v351 = vadd.f32 0.0, %v350
      %v352 = vpop.f32.mrf.mxu0
      %353 = vmatprep.mubr.f32.mxu0 0.0
      %354 = vmatmul.mubr.f32.gmra.mxu0 %v252
      %v355 = vpop.f32.mrf.mxu0
      %v356 = vadd.f32 0.0, %v355
      %v357 = vpop.f32.mrf.mxu0
      %358 = vmatprep.mubr.f32.mxu0 0.0
      %359 = vmatmul.mubr.f32.gmra.mxu0 %v255
      %v360 = vpop.f32.mrf.mxu0
      %v361 = vadd.f32 0.0, %v360
      %v362 = vpop.f32.mrf.mxu0
      %363 = vmatprep.mubr.f32.mxu0 0.0
      %364 = vmatmul.mubr.f32.gmra.mxu0 %v258
      %v365 = vpop.f32.mrf.mxu0
      %v366 = vadd.f32 0.0, %v365
      %v367 = vpop.f32.mrf.mxu0
      %368 = vdwg.mxu0
      %v370 = vsel %vm235, %v213, 0
      %v373 = vsel %vm235, %v214, 0
      %v376 = vsel %vm235, %v215, 0
      %v379 = vsel %vm235, %v216, 0
      %v382 = vsel %vm235, %v217, 0
      %v385 = vsel %vm235, %v218, 0
      %v388 = vsel %vm235, %v219, 0
      %v391 = vsel %vm235, %v220, 0
      %v394 = vsel %vm260, %v222, 0
      %396 = vmatprep.subr.mxu0 0.0
      %397 = vmatpush1.msra.mxu0 0.0
      %398 = vmatprep.subr.mxu0 0.0
      %399 = vmatpush1.msra.mxu0 0.0
      %400 = vmatprep.subr.mxu0 0.0
      %401 = vmatpush1.msra.mxu0 0.0
      %402 = vmatprep.subr.mxu0 0.0
      %403 = vmatpush1.msra.mxu0 0.0
      %404 = vmatprep.subr.mxu0 0.0
      %405 = vmatpush1.msra.mxu0 0.0
      %406 = vmatprep.subr.mxu0 0.0
      %407 = vmatpush1.msra.mxu0 0.0
      %408 = vmatprep.subr.mxu0 0.0
      %409 = vmatpush1.msra.mxu0 0.0
      %410 = vmatprep.subr.mxu0 0.0
      %411 = vmatpush1.msra.mxu0 0.0
      %412 = vmatprep.subr.mxu0 0.0
      %413 = vmatpush1.msra.mxu0 0.0
      %414 = vmatprep.subr.mxu0 0.0
      %415 = vmatpush1.msra.mxu0 0.0
      %416 = vmatprep.subr.mxu0 0.0
      %417 = vmatpush1.msra.mxu0 0.0
      %418 = vmatprep.subr.mxu0 0.0
      %419 = vmatpush1.msra.mxu0 0.0
      %420 = vmatprep.subr.mxu0 0.0
      %421 = vmatpush1.msra.mxu0 0.0
      %422 = vmatprep.subr.mxu0 0.0
      %423 = vmatpush1.msra.mxu0 0.0
      %424 = vmatprep.subr.mxu0 0.0
      %425 = vmatpush1.msra.mxu0 %v394
      %426 = vmatprep.subr.mxu0 0.0
      %427 = vmatpush1.msra.mxu0 %v221
      %428 = vmatprep.subr.mxu0 0.0
      %429 = vmatpush2.msra.mxu0 0.0
      %430 = vmatprep.subr.mxu0 0.0
      %431 = vmatpush2.msra.mxu0 0.0
      %432 = vmatprep.subr.mxu0 0.0
      %433 = vmatpush2.msra.mxu0 0.0
      %434 = vmatprep.subr.mxu0 0.0
      %435 = vmatpush2.msra.mxu0 0.0
      %436 = vmatprep.subr.mxu0 0.0
      %437 = vmatpush2.msra.mxu0 0.0
      %438 = vmatprep.subr.mxu0 0.0
      %439 = vmatpush2.msra.mxu0 0.0
      %440 = vmatprep.subr.mxu0 0.0
      %441 = vmatpush2.msra.mxu0 0.0
      %442 = vmatprep.subr.mxu0 0.0
      %443 = vmatpush2.msra.mxu0 0.0
      %444 = vmatprep.subr.mxu0 0.0
      %445 = vmatpush2.msra.mxu0 0.0
      %446 = vmatprep.subr.mxu0 0.0
      %447 = vmatpush2.msra.mxu0 0.0
      %448 = vmatprep.subr.mxu0 0.0
      %449 = vmatpush2.msra.mxu0 0.0
      %450 = vmatprep.subr.mxu0 0.0
      %451 = vmatpush2.msra.mxu0 0.0
      %452 = vmatprep.subr.mxu0 0.0
      %453 = vmatpush2.msra.mxu0 0.0
      %454 = vmatprep.subr.mxu0 0.0
      %455 = vmatpush2.msra.mxu0 0.0
      %456 = vmatprep.subr.mxu0 0.0
      %457 = vmatpush2.msra.mxu0 0.0
      %458 = vmatprep.subr.mxu0 0.0
      %459 = vmatpush2.msra.mxu0 0.0
      %460 = vmatprep.mubr.f32.mxu0 0.0
      %461 = vmatmul.mubr.f32.gmra.mxu0 %v370
      %v462 = vpop.f32.mrf.mxu0
      %v463 = vadd.f32 %v331, %v462
      %v464 = vpop.f32.mrf.mxu0
      %465 = vmatprep.mubr.f32.mxu0 0.0
      %466 = vmatmul.mubr.f32.gmra.mxu0 %v373
      %v467 = vpop.f32.mrf.mxu0
      %v468 = vadd.f32 %v336, %v467
      %v469 = vpop.f32.mrf.mxu0
      %470 = vmatprep.mubr.f32.mxu0 0.0
      %471 = vmatmul.mubr.f32.gmra.mxu0 %v376
      %v472 = vpop.f32.mrf.mxu0
      %v473 = vadd.f32 %v341, %v472
      %v474 = vpop.f32.mrf.mxu0
      %475 = vmatprep.mubr.f32.mxu0 0.0
      %476 = vmatmul.mubr.f32.gmra.mxu0 %v379
      %v477 = vpop.f32.mrf.mxu0
      %v478 = vadd.f32 %v346, %v477
      %v479 = vpop.f32.mrf.mxu0
      %480 = vmatprep.mubr.f32.mxu0 0.0
      %481 = vmatmul.mubr.f32.gmra.mxu0 %v382
      %v482 = vpop.f32.mrf.mxu0
      %v483 = vadd.f32 %v351, %v482
      %v484 = vpop.f32.mrf.mxu0
      %485 = vmatprep.mubr.f32.mxu0 0.0
      %486 = vmatmul.mubr.f32.gmra.mxu0 %v385
      %v487 = vpop.f32.mrf.mxu0
      %v488 = vadd.f32 %v356, %v487
      %v489 = vpop.f32.mrf.mxu0
      %490 = vmatprep.mubr.f32.mxu0 0.0
      %491 = vmatmul.mubr.f32.gmra.mxu0 %v388
      %v492 = vpop.f32.mrf.mxu0
      %v493 = vadd.f32 %v361, %v492
      %v494 = vpop.f32.mrf.mxu0
      %495 = vmatprep.mubr.f32.mxu0 0.0
      %496 = vmatmul.mubr.f32.gmra.mxu0 %v391
      %v497 = vpop.f32.mrf.mxu0
      %v498 = vadd.f32 %v366, %v497
      %v499 = vpop.f32.mrf.mxu0
      %500 = vdwg.mxu0
      %v501 = vld [vmem:[%s201 + $0x1] sm:$0xff]
      %v502 = vld [vmem:[%s201 + $0x11] sm:$0xff]
      %v503 = vld [vmem:[%s201 + $0x21] sm:$0xff]
      %v504 = vld [vmem:[%s201 + $0x31] sm:$0xff]
      %v505 = vld [vmem:[%s201 + $0x41] sm:$0xff]
      %v506 = vld [vmem:[%s201 + $0x51] sm:$0xff]
      %v507 = vld [vmem:[%s201 + $0x61] sm:$0xff]
      %v508 = vld [vmem:[%s201 + $0x71] sm:$0xff]
      %s509 = scalar_lea.vmem %s1, 32
      %v510 = vld [vmem:[%s509] sm:$0xff]
      %v511 = vld [vmem:[%s509 + $0x8] sm:$0xf]
      %v513 = vsel %vm235, %v501, 0
      %v516 = vsel %vm235, %v502, 0
      %v519 = vsel %vm235, %v503, 0
      %v522 = vsel %vm235, %v504, 0
      %v525 = vsel %vm235, %v505, 0
      %v528 = vsel %vm235, %v506, 0
      %v531 = vsel %vm235, %v507, 0
      %v534 = vsel %vm235, %v508, 0
      %v537 = vsel %vm260, %v511, 0
      %539 = vmatprep.subr.mxu0 0.0
      %540 = vmatpush1.msra.mxu0 0.0
      %541 = vmatprep.subr.mxu0 0.0
      %542 = vmatpush1.msra.mxu0 0.0
      %543 = vmatprep.subr.mxu0 0.0
      %544 = vmatpush1.msra.mxu0 0.0
      %545 = vmatprep.subr.mxu0 0.0
      %546 = vmatpush1.msra.mxu0 0.0
      %547 = vmatprep.subr.mxu0 0.0
      %548 = vmatpush1.msra.mxu0 0.0
      %549 = vmatprep.subr.mxu0 0.0
      %550 = vmatpush1.msra.mxu0 0.0
      %551 = vmatprep.subr.mxu0 0.0
      %552 = vmatpush1.msra.mxu0 0.0
      %553 = vmatprep.subr.mxu0 0.0
      %554 = vmatpush1.msra.mxu0 0.0
      %555 = vmatprep.subr.mxu0 0.0
      %556 = vmatpush1.msra.mxu0 0.0
      %557 = vmatprep.subr.mxu0 0.0
      %558 = vmatpush1.msra.mxu0 0.0
      %559 = vmatprep.subr.mxu0 0.0
      %560 = vmatpush1.msra.mxu0 0.0
      %561 = vmatprep.subr.mxu0 0.0
      %562 = vmatpush1.msra.mxu0 0.0
      %563 = vmatprep.subr.mxu0 0.0
      %564 = vmatpush1.msra.mxu0 0.0
      %565 = vmatprep.subr.mxu0 0.0
      %566 = vmatpush1.msra.mxu0 0.0
      %567 = vmatprep.subr.mxu0 0.0
      %568 = vmatpush1.msra.mxu0 %v537
      %569 = vmatprep.subr.mxu0 0.0
      %570 = vmatpush1.msra.mxu0 %v510
      %571 = vmatprep.subr.mxu0 0.0
      %572 = vmatpush2.msra.mxu0 0.0
      %573 = vmatprep.subr.mxu0 0.0
      %574 = vmatpush2.msra.mxu0 0.0
      %575 = vmatprep.subr.mxu0 0.0
      %576 = vmatpush2.msra.mxu0 0.0
      %577 = vmatprep.subr.mxu0 0.0
      %578 = vmatpush2.msra.mxu0 0.0
      %579 = vmatprep.subr.mxu0 0.0
      %580 = vmatpush2.msra.mxu0 0.0
      %581 = vmatprep.subr.mxu0 0.0
      %582 = vmatpush2.msra.mxu0 0.0
      %583 = vmatprep.subr.mxu0 0.0
      %584 = vmatpush2.msra.mxu0 0.0
      %585 = vmatprep.subr.mxu0 0.0
      %586 = vmatpush2.msra.mxu0 0.0
      %587 = vmatprep.subr.mxu0 0.0
      %588 = vmatpush2.msra.mxu0 0.0
      %589 = vmatprep.subr.mxu0 0.0
      %590 = vmatpush2.msra.mxu0 0.0
      %591 = vmatprep.subr.mxu0 0.0
      %592 = vmatpush2.msra.mxu0 0.0
      %593 = vmatprep.subr.mxu0 0.0
      %594 = vmatpush2.msra.mxu0 0.0
      %595 = vmatprep.subr.mxu0 0.0
      %596 = vmatpush2.msra.mxu0 0.0
      %597 = vmatprep.subr.mxu0 0.0
      %598 = vmatpush2.msra.mxu0 0.0
      %599 = vmatprep.subr.mxu0 0.0
      %600 = vmatpush2.msra.mxu0 0.0
      %601 = vmatprep.subr.mxu0 0.0
      %602 = vmatpush2.msra.mxu0 0.0
      %603 = vmatprep.mubr.f32.mxu0 0.0
      %604 = vmatmul.mubr.f32.gmra.mxu0 %v513
      %v605 = vpop.f32.mrf.mxu0
      %v606 = vadd.f32 0.0, %v605
      %v607 = vpop.f32.mrf.mxu0
      %608 = vmatprep.mubr.f32.mxu0 0.0
      %609 = vmatmul.mubr.f32.gmra.mxu0 %v516
      %v610 = vpop.f32.mrf.mxu0
      %v611 = vadd.f32 0.0, %v610
      %v612 = vpop.f32.mrf.mxu0
      %613 = vmatprep.mubr.f32.mxu0 0.0
      %614 = vmatmul.mubr.f32.gmra.mxu0 %v519
      %v615 = vpop.f32.mrf.mxu0
      %v616 = vadd.f32 0.0, %v615
      %v617 = vpop.f32.mrf.mxu0
      %618 = vmatprep.mubr.f32.mxu0 0.0
      %619 = vmatmul.mubr.f32.gmra.mxu0 %v522
      %v620 = vpop.f32.mrf.mxu0
      %v621 = vadd.f32 0.0, %v620
      %v622 = vpop.f32.mrf.mxu0
      %623 = vmatprep.mubr.f32.mxu0 0.0
      %624 = vmatmul.mubr.f32.gmra.mxu0 %v525
      %v625 = vpop.f32.mrf.mxu0
      %v626 = vadd.f32 0.0, %v625
      %v627 = vpop.f32.mrf.mxu0
      %628 = vmatprep.mubr.f32.mxu0 0.0
      %629 = vmatmul.mubr.f32.gmra.mxu0 %v528
      %v630 = vpop.f32.mrf.mxu0
      %v631 = vadd.f32 0.0, %v630
      %v632 = vpop.f32.mrf.mxu0
      %633 = vmatprep.mubr.f32.mxu0 0.0
      %634 = vmatmul.mubr.f32.gmra.mxu0 %v531
      %v635 = vpop.f32.mrf.mxu0
      %v636 = vadd.f32 0.0, %v635
      %v637 = vpop.f32.mrf.mxu0
      %638 = vmatprep.mubr.f32.mxu0 0.0
      %639 = vmatmul.mubr.f32.gmra.mxu0 %v534
      %v640 = vpop.f32.mrf.mxu0
      %v641 = vadd.f32 0.0, %v640
      %v642 = vpop.f32.mrf.mxu0
      %643 = vdwg.mxu0
      %v644 = vadd.f32 %v463, %v606
      %v645 = vadd.f32 %v468, %v611
      %v646 = vadd.f32 %v473, %v616
      %v647 = vadd.f32 %v478, %v621
      %v648 = vadd.f32 %v483, %v626
      %v649 = vadd.f32 %v488, %v631
      %v650 = vadd.f32 %v493, %v636
      %v651 = vadd.f32 %v498, %v641
      %v652 = vld [vmem:[%s2] sm:$0x1]
      %v654 = vlaneseq
      %v655 = vshrl.u32 %v654, 7
      %v656 = vsub.s32 0, %v655
      %v657 = vrot.slane %v652, %v656
      %v659 = vadd.f32 %v644, %v657
      %v660 = vadd.f32 %v645, %v657
      %v661 = vadd.f32 %v646, %v657
      %v662 = vadd.f32 %v647, %v657
      %v663 = vadd.f32 %v648, %v657
      %v664 = vadd.f32 %v649, %v657
      %v665 = vadd.f32 %v650, %v657
      %v666 = vadd.f32 %v651, %v657
      %vm667 = vcmask 31744
      %668 = vst.msk [vmem:[%s211] sm:$0xff] %vm667, %v659
      %669 = vst.msk [vmem:[%s211 + $0x8] sm:$0xff] %vm667, %v660
      %670 = vst.msk [vmem:[%s211 + $0x10] sm:$0xff] %vm667, %v661
      %671 = vst.msk [vmem:[%s211 + $0x18] sm:$0xff] %vm667, %v662
      %672 = vst.msk [vmem:[%s211 + $0x20] sm:$0xff] %vm667, %v663
      %673 = vst.msk [vmem:[%s211 + $0x28] sm:$0xff] %vm667, %v664
      %674 = vst.msk [vmem:[%s211 + $0x30] sm:$0xff] %vm667, %v665
      %675 = vst.msk [vmem:[%s211 + $0x38] sm:$0xff] %vm667, %v666
      %s676 = smul.u32 8, %s19
      %p677 = scmp.lt.s32.totalorder %s18, 1
      %s678 = scalar_select %p677, %s18, 1
      %p679 = scmp.lt.s32.totalorder %s676, 7
      %s680 = scalar_select %p679, %s676, 7
      %s681 = smul.addr %s678, 8
      %s682 = sadd.s32 %s680, %s681
      %s683 = smul.addr %s682, 8
      %s684 = scalar_lea.vmem %s3, %s683
      // Predicated region
      $region33: #{_downsample_forward.1} parent=31 // pred_check
        %p685 = pneg %p116
      $region34: #{_downsample_forward.1} parent=31 // pred_check_branch
        %687 = sbr.rel (%p685) target = $region36
      $region35: #{_downsample_forward.1} parent=31 // pred_region
        %s688 = smul.u32 8, %s19
      $region36: #{_downsample_forward.1} parent=31 // pred_fallthru
        _
    $region32: #{_downsample_forward.1} parent=5 // pred_fallthru
      _
    %p689 = scmp.le.s32.totalorder 2, %s9
    // Predicated region
    $region37: #{_downsample_forward.1} parent=5 // pred_check
      %p690 = pneg %p689
    $region38: #{_downsample_forward.1} parent=5 // pred_check_branch
      %692 = sbr.rel (%p690) target = $region40
    $region39: #{_downsample_forward.1} parent=5 // pred_region
      %s693 = ssub.s32 %s9, 2
      // Predicated region
      $region41: #{_downsample_forward.1} parent=39 // pred_check
        %p694 = pneg %p122
      $region42: #{_downsample_forward.1} parent=39 // pred_check_branch
        %696 = sbr.rel (%p694) target = $region44
      $region43: #{_downsample_forward.1} parent=39 // pred_region
        %s697 = smul.u32 8, %s21
        %p698 = scmp.lt.s32.totalorder %s20, 1
        %s699 = scalar_select %p698, %s20, 1
        %p700 = scmp.lt.s32.totalorder %s697, 7
        %s701 = scalar_select %p700, %s697, 7
        %s702 = smul.addr %s699, 8
        %s703 = sadd.s32 %s701, %s702
        %s704 = smul.addr %s703, 8
        %s705 = scalar_lea.vmem %s3, %s704
      $region44: #{_downsample_forward.1} parent=39 // pred_fallthru
        _
    $region40: #{_downsample_forward.1} parent=5 // pred_fallthru
      _
  $region6: #{_downsample_forward.1} parent=0 // loop_footer
    %s13 = sadd.s32 1, %s9
  $region7: #{_downsample_forward.1} parent=0 // loop_footer_branch
    %8 = sbr.rel target = $region3
  $region8: #{_downsample_forward.1} parent=0 // loop_exit
    _

</llo_original>
